<compile_context>
chip_gen: v7x
topology: tpu7x:2x2x1
jax: 0.10.0
libtpu: 0.0.40
codegen_flags: <defaults>
</compile_context>

<pallas_src>
import jax
import jax.numpy as jnp
from jax.experimental import pallas as pl
from jax.experimental.pallas import tpu as pltpu


def _mlp_kernel(x_ref, w1_ref, b1_ref, w2_ref, b2_ref, o_ref):
    # fc1: (tb, F_in) @ (F_in, H) -> (tb, H), f32 accumulation on MXU.
    h = jnp.dot(x_ref[...], w1_ref[...], preferred_element_type=jnp.float32)
    # bias + ReLU in f32 (keep elementwise math f32; v5e has no bf16 VPU).
    h = jnp.maximum(h + b1_ref[...], 0.0)
    # TODO(synk): training-mode dropout (p=0.4) would need a pltpu.prng_random_bits
    #             mask + 1/(1-p) scaling here; eval/inference mode is identity.
    # fc3: (tb, H) @ (H, F_out) -> (tb, F_out), add b2 once, write output tile.
    out = jnp.dot(h.astype(w2_ref.dtype), w2_ref[...],
                  preferred_element_type=jnp.float32) + b2_ref[...]
    o_ref[...] = out.astype(o_ref.dtype)


def embedding_net_forward(x, w1_t, b1, w2_t, b2, *, tb=256):
    """x: (B, F_in) bf16/f32; w1_t: (F_in, H) bf16; b1: (1, H) f32;
    w2_t: (H, F_out) bf16; b2: (1, F_out) f32. Returns (B, F_out) f32."""
    B, F_in = x.shape
    F_in2, H = w1_t.shape
    H2, F_out = w2_t.shape
    assert F_in == F_in2 and H == H2

    # Pick a sublane-aligned batch tile (multiple of 8), never bigger than needed.
    b_aligned = max(8, ((B + 7) // 8) * 8)
    tb = min(tb, b_aligned)
    tb = ((tb + 7) // 8) * 8
    B_pad = ((B + tb - 1) // tb) * tb
    if B_pad != B:
        x = jnp.pad(x, ((0, B_pad - B), (0, 0)))
    n_b = B_pad // tb

    cost = pl.CostEstimate(
        flops=2 * B_pad * (F_in * H + H * F_out),
        transcendentals=0,
        bytes_accessed=(B_pad * F_in * x.dtype.itemsize
                        + w1_t.size * w1_t.dtype.itemsize
                        + w2_t.size * w2_t.dtype.itemsize
                        + b1.size * b1.dtype.itemsize
                        + b2.size * b2.dtype.itemsize
                        + B_pad * F_out * 4),
    )

    out = pl.pallas_call(
        _mlp_kernel,
        out_shape=jax.ShapeDtypeStruct((B_pad, F_out), jnp.float32),
        grid=(n_b,),
        in_specs=[
            pl.BlockSpec((tb, F_in), lambda i: (i, 0)),      # x: batch tile (pipelined)
            pl.BlockSpec((F_in, H), lambda i: (0, 0)),       # w1: resident, one contiguous DMA
            pl.BlockSpec((1, H), lambda i: (0, 0)),          # b1: resident
            pl.BlockSpec((H, F_out), lambda i: (0, 0)),      # w2: resident, one contiguous DMA
            pl.BlockSpec((1, F_out), lambda i: (0, 0)),      # b2: resident
        ],
        out_specs=pl.BlockSpec((tb, F_out), lambda i: (i, 0)),
        compiler_params=pltpu.CompilerParams(
            # Batch axis is embarrassingly parallel -> v7x megacore splits it across TCs.
            dimension_semantics=("parallel",),
        ),
        cost_estimate=cost,
    )(x, w1_t, b1, w2_t, b2)
    return out[:B]


def init_params(key, n_features_in=512, hidden=512, n_features_out=256):
    """Deterministic Kaiming-normal-style init (matches weights_init_kaiming intent).

    Weights returned pre-transposed to (F_in, F_out) and cast to bf16 (MXU-native);
    biases stay f32 as (1, F) rows.
    """
    k1, k2 = jax.random.split(key, 2)
    # kaiming normal, fan_out mode: std = sqrt(2 / fan_out)
    w1 = jax.random.normal(k1, (hidden, n_features_in), jnp.float32) * jnp.sqrt(2.0 / hidden)
    b1 = jnp.zeros((hidden,), jnp.float32)
    w2 = jax.random.normal(k2, (n_features_out, hidden), jnp.float32) * jnp.sqrt(2.0 / n_features_out)
    b2 = jnp.zeros((n_features_out,), jnp.float32)
    return (w1.T.astype(jnp.bfloat16), b1.reshape(1, -1),
            w2.T.astype(jnp.bfloat16), b2.reshape(1, -1))


if __name__ == "__main__":
    key = jax.random.PRNGKey(0)
    kx, kp = jax.random.split(key)

    B, F_IN, HID, F_OUT = 8, 512, 512, 256
    x_f32 = jax.random.normal(kx, (B, F_IN), jnp.float32)
    w1_t, b1, w2_t, b2 = init_params(kp, F_IN, HID, F_OUT)

    x = x_f32.astype(jnp.bfloat16)  # bf16 activations, f32 accumulation in-kernel

    out = embedding_net_forward(x, w1_t, b1, w2_t, b2)
    out = jax.block_until_ready(out)

    # Reference (eval-mode forward) in plain JAX with the same bf16 operand rounding.
    xr = x.astype(jnp.float32)
    w1r = w1_t.astype(jnp.float32)
    w2r = w2_t.astype(jnp.float32)
    h_ref = jnp.maximum(xr @ w1r + b1, 0.0).astype(jnp.bfloat16).astype(jnp.float32)
    ref = h_ref @ w2r + b2

    assert out.shape == (B, F_OUT)
    assert jnp.allclose(out, ref, atol=2e-2, rtol=2e-2), float(jnp.max(jnp.abs(out - ref)))

    print("KERNEL_OK")
</pallas_src>

<mosaic_0001>
module attributes {stable_mosaic.version = 11 : i64} {
  func.func @_mlp_kernel(%arg0: i32, %arg1: memref<8x512xbf16, #tpu.memory_space<vmem>>, %arg2: memref<512x512xbf16, #tpu.memory_space<vmem>>, %arg3: memref<1x512xf32, #tpu.memory_space<vmem>>, %arg4: memref<512x256xbf16, #tpu.memory_space<vmem>>, %arg5: memref<1x256xf32, #tpu.memory_space<vmem>>, %arg6: memref<8x256xf32, #tpu.memory_space<vmem>>) attributes {dimension_semantics = [#tpu.dimension_semantics<parallel>], iteration_bounds = array<i64: 1>, scalar_prefetch = 0 : i64, scratch_operands = 0 : i64, tpu.core_type = #tpu.core_type<tc>, window_params = [{transform_indices = @transform_0, window_bounds = array<i64: 8, 512>}, {pipeline_mode = #tpu.pipeline_mode<synchronous>, transform_indices = @transform_1, window_bounds = array<i64: 512, 512>}, {pipeline_mode = #tpu.pipeline_mode<synchronous>, transform_indices = @transform_2, window_bounds = array<i64: 1, 512>}, {pipeline_mode = #tpu.pipeline_mode<synchronous>, transform_indices = @transform_3, window_bounds = array<i64: 512, 256>}, {pipeline_mode = #tpu.pipeline_mode<synchronous>, transform_indices = @transform_4, window_bounds = array<i64: 1, 256>}, {transform_indices = @transform_5, window_bounds = array<i64: 8, 256>}]} {
    %c0 = arith.constant 0 : index
    %c0_0 = arith.constant 0 : index
    %0 = vector.load %arg1[%c0, %c0_0] : memref<8x512xbf16, #tpu.memory_space<vmem>>, vector<8x512xbf16>
    %c0_1 = arith.constant 0 : index
    %c0_2 = arith.constant 0 : index
    %1 = vector.load %arg2[%c0_1, %c0_2] : memref<512x512xbf16, #tpu.memory_space<vmem>>, vector<512x512xbf16>
    %cst = arith.constant dense<0.000000e+00> : vector<8x512xf32>
    %2 = tpu.matmul %0, %1, %cst {dimension_numbers = #tpu.dot_dimension_numbers<[1], [0], [0], [1], [0, 0, 1, 1], [], []>} : vector<8x512xbf16>, vector<512x512xbf16>, vector<8x512xf32> -> vector<8x512xf32>
    %c0_3 = arith.constant 0 : index
    %c0_4 = arith.constant 0 : index
    %3 = vector.load %arg3[%c0_3, %c0_4] : memref<1x512xf32, #tpu.memory_space<vmem>>, vector<1x512xf32>
    %4 = vector.broadcast %3 : vector<1x512xf32> to vector<8x512xf32>
    %5 = arith.addf %2, %4 : vector<8x512xf32>
    %cst_5 = arith.constant 0.000000e+00 : f32
    %6 = vector.broadcast %cst_5 : f32 to vector<8x512xf32>
    %7 = arith.maximumf %5, %6 : vector<8x512xf32>
    %8 = arith.truncf %7 : vector<8x512xf32> to vector<8x512xbf16>
    %c0_6 = arith.constant 0 : index
    %c0_7 = arith.constant 0 : index
    %9 = vector.load %arg4[%c0_6, %c0_7] : memref<512x256xbf16, #tpu.memory_space<vmem>>, vector<512x256xbf16>
    %cst_8 = arith.constant dense<0.000000e+00> : vector<8x256xf32>
    %10 = tpu.matmul %8, %9, %cst_8 {dimension_numbers = #tpu.dot_dimension_numbers<[1], [0], [0], [1], [0, 0, 1, 1], [], []>} : vector<8x512xbf16>, vector<512x256xbf16>, vector<8x256xf32> -> vector<8x256xf32>
    %c0_9 = arith.constant 0 : index
    %c0_10 = arith.constant 0 : index
    %11 = vector.load %arg5[%c0_9, %c0_10] : memref<1x256xf32, #tpu.memory_space<vmem>>, vector<1x256xf32>
    %12 = vector.broadcast %11 : vector<1x256xf32> to vector<8x256xf32>
    %13 = arith.addf %10, %12 : vector<8x256xf32>
    %c0_11 = arith.constant 0 : index
    %c0_12 = arith.constant 0 : index
    %14 = vector.load %arg6[%c0_11, %c0_12] : memref<8x256xf32, #tpu.memory_space<vmem>>, vector<8x256xf32>
    tpu.vector_store %arg6[%c0_11, %c0_12], %13 {strides = array<i32>} : memref<8x256xf32, #tpu.memory_space<vmem>>, vector<8x256xf32>,
    return
  }
  func.func @transform_0(%arg0: i32) -> (i32, i32) {
    %c0_i32 = arith.constant 0 : i32
    %c0_i32_0 = arith.constant 0 : i32
    return %arg0, %c0_i32 : i32, i32
  }
  func.func @transform_1(%arg0: i32) -> (i32, i32) {
    %c0_i32 = arith.constant 0 : i32
    %c0_i32_0 = arith.constant 0 : i32
    %c0_i32_1 = arith.constant 0 : i32
    return %c0_i32, %c0_i32_0 : i32, i32
  }
  func.func @transform_2(%arg0: i32) -> (i32, i32) {
    %c0_i32 = arith.constant 0 : i32
    %c0_i32_0 = arith.constant 0 : i32
    %c0_i32_1 = arith.constant 0 : i32
    return %c0_i32, %c0_i32_0 : i32, i32
  }
  func.func @transform_3(%arg0: i32) -> (i32, i32) {
    %c0_i32 = arith.constant 0 : i32
    %c0_i32_0 = arith.constant 0 : i32
    %c0_i32_1 = arith.constant 0 : i32
    return %c0_i32, %c0_i32_0 : i32, i32
  }
  func.func @transform_4(%arg0: i32) -> (i32, i32) {
    %c0_i32 = arith.constant 0 : i32
    %c0_i32_0 = arith.constant 0 : i32
    %c0_i32_1 = arith.constant 0 : i32
    return %c0_i32, %c0_i32_0 : i32, i32
  }
  func.func @transform_5(%arg0: i32) -> (i32, i32) {
    %c0_i32 = arith.constant 0 : i32
    %c0_i32_0 = arith.constant 0 : i32
    return %arg0, %c0_i32 : i32, i32
  }
}

</mosaic_0001>

<llo_original>
// kernel: tpu_custom_call.1
$region0: #{tpu_custom_call.1}
  #allocation0 [shape = 'u32[]', space=smem, size = 0x4, offset = 0x4, fixed_abs, tag = 'smem constant byte address 0x4 - core index']
  #allocation1 [shape = 'u32[144,128]{1,0:T(1,128)}', space=vmem, size = 0x12000, scoped, tag = 'internal scratch']
  %s0 = inlined_call_operand.hbm [shape: bf16[8,512], index: 0, kind: input, shape index: {}]
  %s1 = inlined_call_operand.hbm [shape: bf16[512,512], index: 1, kind: input, shape index: {}]
  %s2 = inlined_call_operand.vmem [shape: f32[1,512], index: 2, kind: input, shape index: {}]
  %s3 = inlined_call_operand.hbm [shape: bf16[512,256], index: 3, kind: input, shape index: {}]
  %s4 = inlined_call_operand.vmem [shape: f32[1,256], index: 4, kind: input, shape index: {}]
  %s5 = inlined_call_operand.hbm [shape: f32[8,256], index: 5, kind: output, shape index: {}]
  %s6 = sld [smem:[#allocation0]]
  $region42: #{tpu_custom_call.1} parent=0
    _
  %s8 = ssub.s32 1, %s6
  %s9 = scalar_select 0, %s8, %s6
  $region1: #{tpu_custom_call.1} parent=0
    #allocation2 [shape = 'u8[8192]{0}', space=vmem, size = 0x2000, scoped, tag = 'input window, operand 0, single buffered']
    #allocation3 [shape = 's32[1]{0}', space=sflag, size = 0x4, scoped, tag = 'scoped memory for tpu_custom_call.1']
    #allocation4 [shape = 's32[1]{0}', space=sflag, size = 0x4, scoped, tag = 'scoped memory for tpu_custom_call.1']
    #allocation5 [shape = 'u8[524288]{0}', space=vmem, size = 0x80000, scoped, tag = 'input window, operand 1, single buffered']
    #allocation6 [shape = 's32[1]{0}', space=sflag, size = 0x4, scoped, tag = 'scoped memory for tpu_custom_call.1']
    #allocation7 [shape = 'u8[262144]{0}', space=vmem, size = 0x40000, scoped, tag = 'input window, operand 3, single buffered']
    #allocation8 [shape = 'u8[8192]{0}', space=vmem, size = 0x2000, scoped, tag = 'output window, operand 0, single buffered']
    %10 = vsyncpa [#allocation3], 0
    %11 = vsyncpa [#allocation6], 0
    %12 = vsyncpa [#allocation4], 0
    // Predicated region
    $region2: #{tpu_custom_call.1} parent=1 // pred_check
      _
    $region3: #{tpu_custom_call.1} parent=1 // pred_check_branch
      %14 = sbr.rel (0) target = $region5
    $region4: #{tpu_custom_call.1} parent=1 // pred_region
      %s16 = ssub.s32 256, 256
      %17 = vsyncadd [#allocation3], %s16
      %s19 = sshll.u32 [#allocation2], 4
      %s20 = int_to_ptr.vmem [resolvable:$true] %s19
      %22 = dma.hbm_to_vmem [thread:$0]  %s0, 256, %s20, [#allocation3]
    $region5: #{tpu_custom_call.1} parent=1 // pred_fallthru
      _
    // Predicated region
    $region6: #{tpu_custom_call.1} parent=1 // pred_check
      _
    $region7: #{tpu_custom_call.1} parent=1 // pred_check_branch
      %24 = sbr.rel (0) target = $region9
    $region8: #{tpu_custom_call.1} parent=1 // pred_region
      %s26 = ssub.s32 16384, 16384
      %27 = vsyncadd [#allocation6], %s26
      %s28 = sshll.u32 [#allocation5], 4
      %s29 = int_to_ptr.vmem [resolvable:$true] %s28
      %34 = dma.hbm_to_vmem [thread:$0]  %s1, 16384, %s29, [#allocation6], 256, 256, 16
    $region9: #{tpu_custom_call.1} parent=1 // pred_fallthru
      _
    // Predicated region
    $region10: #{tpu_custom_call.1} parent=1 // pred_check
      _
    $region11: #{tpu_custom_call.1} parent=1 // pred_check_branch
      %36 = sbr.rel (0) target = $region13
    $region12: #{tpu_custom_call.1} parent=1 // pred_region
      _
    $region13: #{tpu_custom_call.1} parent=1 // pred_fallthru
      _
    // Predicated region
    $region14: #{tpu_custom_call.1} parent=1 // pred_check
      _
    $region15: #{tpu_custom_call.1} parent=1 // pred_check_branch
      %38 = sbr.rel (0) target = $region17
    $region16: #{tpu_custom_call.1} parent=1 // pred_region
      %s40 = ssub.s32 8192, 8192
      %41 = vsyncadd [#allocation6], %s40
      %s42 = sshll.u32 [#allocation7], 4
      %s43 = int_to_ptr.vmem [resolvable:$true] %s42
      %48 = dma.hbm_to_vmem [thread:$0]  %s3, 8192, %s43, [#allocation6], 128, 128, 8
    $region17: #{tpu_custom_call.1} parent=1 // pred_fallthru
      _
    // Predicated region
    $region18: #{tpu_custom_call.1} parent=1 // pred_check
      _
    $region19: #{tpu_custom_call.1} parent=1 // pred_check_branch
      %50 = sbr.rel (0) target = $region21
    $region20: #{tpu_custom_call.1} parent=1 // pred_region
      _
    $region21: #{tpu_custom_call.1} parent=1 // pred_fallthru
      _
    // Predicated region
    $region22: #{tpu_custom_call.1} parent=1 // pred_check
      _
    $region23: #{tpu_custom_call.1} parent=1 // pred_check_branch
      %52 = sbr.rel (0) target = $region25
    $region24: #{tpu_custom_call.1} parent=1 // pred_region
      %53 = dma.done [#allocation3], 256
    $region25: #{tpu_custom_call.1} parent=1 // pred_fallthru
      _
    // Predicated region
    $region26: #{tpu_custom_call.1} parent=1 // pred_check
      _
    $region27: #{tpu_custom_call.1} parent=1 // pred_check_branch
      %55 = sbr.rel (0) target = $region29
    $region28: #{tpu_custom_call.1} parent=1 // pred_region
      %56 = dma.done [#allocation6], 16384
    $region29: #{tpu_custom_call.1} parent=1 // pred_fallthru
      _
    // Predicated region
    $region30: #{tpu_custom_call.1} parent=1 // pred_check
      _
    $region31: #{tpu_custom_call.1} parent=1 // pred_check_branch
      %58 = sbr.rel (0) target = $region33
    $region32: #{tpu_custom_call.1} parent=1 // pred_region
      %59 = dma.done [#allocation6], 8192
    $region33: #{tpu_custom_call.1} parent=1 // pred_fallthru
      _
    %v60 = vld [vmem:[#allocation2] sm:$0xff]
    %v61 = vld [vmem:[#allocation2 + $0x8] sm:$0xff]
    %v62 = vld [vmem:[#allocation5] sm:$0xff]
    %v63 = vld [vmem:[#allocation5 + $0x8] sm:$0xff]
    %v64 = vld [vmem:[#allocation5 + $0x10] sm:$0xff]
    %v65 = vld [vmem:[#allocation5 + $0x18] sm:$0xff]
    %v66 = vld [vmem:[#allocation5 + $0x20] sm:$0xff]
    %v67 = vld [vmem:[#allocation5 + $0x28] sm:$0xff]
    %v68 = vld [vmem:[#allocation5 + $0x30] sm:$0xff]
    %v69 = vld [vmem:[#allocation5 + $0x38] sm:$0xff]
    %v70 = vld [vmem:[#allocation5 + $0x40] sm:$0xff]
    %v71 = vld [vmem:[#allocation5 + $0x48] sm:$0xff]
    %v72 = vld [vmem:[#allocation5 + $0x50] sm:$0xff]
    %v73 = vld [vmem:[#allocation5 + $0x58] sm:$0xff]
    %v74 = vld [vmem:[#allocation5 + $0x60] sm:$0xff]
    %v75 = vld [vmem:[#allocation5 + $0x68] sm:$0xff]
    %v76 = vld [vmem:[#allocation5 + $0x70] sm:$0xff]
    %v77 = vld [vmem:[#allocation5 + $0x78] sm:$0xff]
    %v78 = vld [vmem:[#allocation5 + $0x80] sm:$0xff]
    %v79 = vld [vmem:[#allocation5 + $0x88] sm:$0xff]
    %v80 = vld [vmem:[#allocation5 + $0x90] sm:$0xff]
    %v81 = vld [vmem:[#allocation5 + $0x98] sm:$0xff]
    %v82 = vld [vmem:[#allocation5 + $0xa0] sm:$0xff]
    %v83 = vld [vmem:[#allocation5 + $0xa8] sm:$0xff]
    %v84 = vld [vmem:[#allocation5 + $0xb0] sm:$0xff]
    %v85 = vld [vmem:[#allocation5 + $0xb8] sm:$0xff]
    %v86 = vld [vmem:[#allocation5 + $0xc0] sm:$0xff]
    %v87 = vld [vmem:[#allocation5 + $0xc8] sm:$0xff]
    %v88 = vld [vmem:[#allocation5 + $0xd0] sm:$0xff]
    %v89 = vld [vmem:[#allocation5 + $0xd8] sm:$0xff]
    %v90 = vld [vmem:[#allocation5 + $0xe0] sm:$0xff]
    %v91 = vld [vmem:[#allocation5 + $0xe8] sm:$0xff]
    %v92 = vld [vmem:[#allocation5 + $0xf0] sm:$0xff]
    %v93 = vld [vmem:[#allocation5 + $0xf8] sm:$0xff]
    %v94 = vld [vmem:[#allocation5 + $0x100] sm:$0xff]
    %v95 = vld [vmem:[#allocation5 + $0x108] sm:$0xff]
    %v96 = vld [vmem:[#allocation5 + $0x110] sm:$0xff]
    %v97 = vld [vmem:[#allocation5 + $0x118] sm:$0xff]
    %v98 = vld [vmem:[#allocation5 + $0x120] sm:$0xff]
    %v99 = vld [vmem:[#allocation5 + $0x128] sm:$0xff]
    %v100 = vld [vmem:[#allocation5 + $0x130] sm:$0xff]
    %v101 = vld [vmem:[#allocation5 + $0x138] sm:$0xff]
    %v102 = vld [vmem:[#allocation5 + $0x140] sm:$0xff]
    %v103 = vld [vmem:[#allocation5 + $0x148] sm:$0xff]
    %v104 = vld [vmem:[#allocation5 + $0x150] sm:$0xff]
    %v105 = vld [vmem:[#allocation5 + $0x158] sm:$0xff]
    %v106 = vld [vmem:[#allocation5 + $0x160] sm:$0xff]
    %v107 = vld [vmem:[#allocation5 + $0x168] sm:$0xff]
    %v108 = vld [vmem:[#allocation5 + $0x170] sm:$0xff]
    %v109 = vld [vmem:[#allocation5 + $0x178] sm:$0xff]
    %v110 = vld [vmem:[#allocation5 + $0x180] sm:$0xff]
    %v111 = vld [vmem:[#allocation5 + $0x188] sm:$0xff]
    %v112 = vld [vmem:[#allocation5 + $0x190] sm:$0xff]
    %v113 = vld [vmem:[#allocation5 + $0x198] sm:$0xff]
    %v114 = vld [vmem:[#allocation5 + $0x1a0] sm:$0xff]
    %v115 = vld [vmem:[#allocation5 + $0x1a8] sm:$0xff]
    %v116 = vld [vmem:[#allocation5 + $0x1b0] sm:$0xff]
    %v117 = vld [vmem:[#allocation5 + $0x1b8] sm:$0xff]
    %v118 = vld [vmem:[#allocation5 + $0x1c0] sm:$0xff]
    %v119 = vld [vmem:[#allocation5 + $0x1c8] sm:$0xff]
    %v120 = vld [vmem:[#allocation5 + $0x1d0] sm:$0xff]
    %v121 = vld [vmem:[#allocation5 + $0x1d8] sm:$0xff]
    %v122 = vld [vmem:[#allocation5 + $0x1e0] sm:$0xff]
    %v123 = vld [vmem:[#allocation5 + $0x1e8] sm:$0xff]
    %v124 = vld [vmem:[#allocation5 + $0x1f0] sm:$0xff]
    %v125 = vld [vmem:[#allocation5 + $0x1f8] sm:$0xff]
    %v126 = vld [vmem:[#allocation5 + $0x200] sm:$0xff]
    %v127 = vld [vmem:[#allocation5 + $0x208] sm:$0xff]
    %v128 = vld [vmem:[#allocation5 + $0x210] sm:$0xff]
    %v129 = vld [vmem:[#allocation5 + $0x218] sm:$0xff]
    %v130 = vld [vmem:[#allocation5 + $0x220] sm:$0xff]
    %v131 = vld [vmem:[#allocation5 + $0x228] sm:$0xff]
    %v132 = vld [vmem:[#allocation5 + $0x230] sm:$0xff]
    %v133 = vld [vmem:[#allocation5 + $0x238] sm:$0xff]
    %v134 = vld [vmem:[#allocation5 + $0x240] sm:$0xff]
    %v135 = vld [vmem:[#allocation5 + $0x248] sm:$0xff]
    %v136 = vld [vmem:[#allocation5 + $0x250] sm:$0xff]
    %v137 = vld [vmem:[#allocation5 + $0x258] sm:$0xff]
    %v138 = vld [vmem:[#allocation5 + $0x260] sm:$0xff]
    %v139 = vld [vmem:[#allocation5 + $0x268] sm:$0xff]
    %v140 = vld [vmem:[#allocation5 + $0x270] sm:$0xff]
    %v141 = vld [vmem:[#allocation5 + $0x278] sm:$0xff]
    %v142 = vld [vmem:[#allocation5 + $0x280] sm:$0xff]
    %v143 = vld [vmem:[#allocation5 + $0x288] sm:$0xff]
    %v144 = vld [vmem:[#allocation5 + $0x290] sm:$0xff]
    %v145 = vld [vmem:[#allocation5 + $0x298] sm:$0xff]
    %v146 = vld [vmem:[#allocation5 + $0x2a0] sm:$0xff]
    %v147 = vld [vmem:[#allocation5 + $0x2a8] sm:$0xff]
    %v148 = vld [vmem:[#allocation5 + $0x2b0] sm:$0xff]
    %v149 = vld [vmem:[#allocation5 + $0x2b8] sm:$0xff]
    %v150 = vld [vmem:[#allocation5 + $0x2c0] sm:$0xff]
    %v151 = vld [vmem:[#allocation5 + $0x2c8] sm:$0xff]
    %v152 = vld [vmem:[#allocation5 + $0x2d0] sm:$0xff]
    %v153 = vld [vmem:[#allocation5 + $0x2d8] sm:$0xff]
    %v154 = vld [vmem:[#allocation5 + $0x2e0] sm:$0xff]
    %v155 = vld [vmem:[#allocation5 + $0x2e8] sm:$0xff]
    %v156 = vld [vmem:[#allocation5 + $0x2f0] sm:$0xff]
    %v157 = vld [vmem:[#allocation5 + $0x2f8] sm:$0xff]
    %v158 = vld [vmem:[#allocation5 + $0x300] sm:$0xff]
    %v159 = vld [vmem:[#allocation5 + $0x308] sm:$0xff]
    %v160 = vld [vmem:[#allocation5 + $0x310] sm:$0xff]
    %v161 = vld [vmem:[#allocation5 + $0x318] sm:$0xff]
    %v162 = vld [vmem:[#allocation5 + $0x320] sm:$0xff]
    %v163 = vld [vmem:[#allocation5 + $0x328] sm:$0xff]
    %v164 = vld [vmem:[#allocation5 + $0x330] sm:$0xff]
    %v165 = vld [vmem:[#allocation5 + $0x338] sm:$0xff]
    %v166 = vld [vmem:[#allocation5 + $0x340] sm:$0xff]
    %v167 = vld [vmem:[#allocation5 + $0x348] sm:$0xff]
    %v168 = vld [vmem:[#allocation5 + $0x350] sm:$0xff]
    %v169 = vld [vmem:[#allocation5 + $0x358] sm:$0xff]
    %v170 = vld [vmem:[#allocation5 + $0x360] sm:$0xff]
    %v171 = vld [vmem:[#allocation5 + $0x368] sm:$0xff]
    %v172 = vld [vmem:[#allocation5 + $0x370] sm:$0xff]
    %v173 = vld [vmem:[#allocation5 + $0x378] sm:$0xff]
    %v174 = vld [vmem:[#allocation5 + $0x380] sm:$0xff]
    %v175 = vld [vmem:[#allocation5 + $0x388] sm:$0xff]
    %v176 = vld [vmem:[#allocation5 + $0x390] sm:$0xff]
    %v177 = vld [vmem:[#allocation5 + $0x398] sm:$0xff]
    %v178 = vld [vmem:[#allocation5 + $0x3a0] sm:$0xff]
    %v179 = vld [vmem:[#allocation5 + $0x3a8] sm:$0xff]
    %v180 = vld [vmem:[#allocation5 + $0x3b0] sm:$0xff]
    %v181 = vld [vmem:[#allocation5 + $0x3b8] sm:$0xff]
    %v182 = vld [vmem:[#allocation5 + $0x3c0] sm:$0xff]
    %v183 = vld [vmem:[#allocation5 + $0x3c8] sm:$0xff]
    %v184 = vld [vmem:[#allocation5 + $0x3d0] sm:$0xff]
    %v185 = vld [vmem:[#allocation5 + $0x3d8] sm:$0xff]
    %v186 = vld [vmem:[#allocation5 + $0x3e0] sm:$0xff]
    %v187 = vld [vmem:[#allocation5 + $0x3e8] sm:$0xff]
    %v188 = vld [vmem:[#allocation5 + $0x3f0] sm:$0xff]
    %v189 = vld [vmem:[#allocation5 + $0x3f8] sm:$0xff]
    %v190 = vld [vmem:[%s2] sm:$0xf]
    %v192 = vlaneseq
    %v193 = vshrl.u32 %v192, 7
    %v194 = vsub.s32 0, %v193
    %v195 = vrot.slane %v190, %v194
    %v196 = vlaneseq
    %v197 = vshrl.u32 %v196, 7
    %v198 = vsub.s32 1, %v197
    %v199 = vrot.slane %v190, %v198
    %v200 = vlaneseq
    %v201 = vshrl.u32 %v200, 7
    %v202 = vsub.s32 2, %v201
    %v203 = vrot.slane %v190, %v202
    %v204 = vlaneseq
    %v205 = vshrl.u32 %v204, 7
    %v206 = vsub.s32 3, %v205
    %v207 = vrot.slane %v190, %v206
    %v214 = vunpack.c.l.b16 %v60
    %v215 = vunpack.c.h.b16 %v60
    %v216 = vunpack.c.l.b16 %v61
    %v217 = vunpack.c.h.b16 %v61
    %v218 = vpack.c.b16 %v214, %v214
    %v219 = vpack.c.b16 %v215, %v215
    %v220 = vpack.c.b16 %v216, %v216
    %v221 = vpack.c.b16 %v217, %v217
    %v354 = vunpack.c.l.b16 %v62
    %v355 = vunpack.c.h.b16 %v62
    %v356 = vunpack.c.l.b16 %v63
    %v357 = vunpack.c.h.b16 %v63
    %v358 = vunpack.c.l.b16 %v64
    %v359 = vunpack.c.h.b16 %v64
    %v360 = vunpack.c.l.b16 %v65
    %v361 = vunpack.c.h.b16 %v65
    %v362 = vunpack.c.l.b16 %v66
    %v363 = vunpack.c.h.b16 %v66
    %v364 = vunpack.c.l.b16 %v67
    %v365 = vunpack.c.h.b16 %v67
    %v366 = vunpack.c.l.b16 %v68
    %v367 = vunpack.c.h.b16 %v68
    %v368 = vunpack.c.l.b16 %v69
    %v369 = vunpack.c.h.b16 %v69
    %v370 = vunpack.c.l.b16 %v70
    %v371 = vunpack.c.h.b16 %v70
    %v372 = vunpack.c.l.b16 %v71
    %v373 = vunpack.c.h.b16 %v71
    %v374 = vunpack.c.l.b16 %v72
    %v375 = vunpack.c.h.b16 %v72
    %v376 = vunpack.c.l.b16 %v73
    %v377 = vunpack.c.h.b16 %v73
    %v378 = vunpack.c.l.b16 %v74
    %v379 = vunpack.c.h.b16 %v74
    %v380 = vunpack.c.l.b16 %v75
    %v381 = vunpack.c.h.b16 %v75
    %v382 = vunpack.c.l.b16 %v76
    %v383 = vunpack.c.h.b16 %v76
    %v384 = vunpack.c.l.b16 %v77
    %v385 = vunpack.c.h.b16 %v77
    %v386 = vunpack.c.l.b16 %v78
    %v387 = vunpack.c.h.b16 %v78
    %v388 = vunpack.c.l.b16 %v79
    %v389 = vunpack.c.h.b16 %v79
    %v390 = vunpack.c.l.b16 %v80
    %v391 = vunpack.c.h.b16 %v80
    %v392 = vunpack.c.l.b16 %v81
    %v393 = vunpack.c.h.b16 %v81
    %v394 = vunpack.c.l.b16 %v82
    %v395 = vunpack.c.h.b16 %v82
    %v396 = vunpack.c.l.b16 %v83
    %v397 = vunpack.c.h.b16 %v83
    %v398 = vunpack.c.l.b16 %v84
    %v399 = vunpack.c.h.b16 %v84
    %v400 = vunpack.c.l.b16 %v85
    %v401 = vunpack.c.h.b16 %v85
    %v402 = vunpack.c.l.b16 %v86
    %v403 = vunpack.c.h.b16 %v86
    %v404 = vunpack.c.l.b16 %v87
    %v405 = vunpack.c.h.b16 %v87
    %v406 = vunpack.c.l.b16 %v88
    %v407 = vunpack.c.h.b16 %v88
    %v408 = vunpack.c.l.b16 %v89
    %v409 = vunpack.c.h.b16 %v89
    %v410 = vunpack.c.l.b16 %v90
    %v411 = vunpack.c.h.b16 %v90
    %v412 = vunpack.c.l.b16 %v91
    %v413 = vunpack.c.h.b16 %v91
    %v414 = vunpack.c.l.b16 %v92
    %v415 = vunpack.c.h.b16 %v92
    %v416 = vunpack.c.l.b16 %v93
    %v417 = vunpack.c.h.b16 %v93
    %v418 = vunpack.c.l.b16 %v94
    %v419 = vunpack.c.h.b16 %v94
    %v420 = vunpack.c.l.b16 %v95
    %v421 = vunpack.c.h.b16 %v95
    %v422 = vunpack.c.l.b16 %v96
    %v423 = vunpack.c.h.b16 %v96
    %v424 = vunpack.c.l.b16 %v97
    %v425 = vunpack.c.h.b16 %v97
    %v426 = vunpack.c.l.b16 %v98
    %v427 = vunpack.c.h.b16 %v98
    %v428 = vunpack.c.l.b16 %v99
    %v429 = vunpack.c.h.b16 %v99
    %v430 = vunpack.c.l.b16 %v100
    %v431 = vunpack.c.h.b16 %v100
    %v432 = vunpack.c.l.b16 %v101
    %v433 = vunpack.c.h.b16 %v101
    %v434 = vunpack.c.l.b16 %v102
    %v435 = vunpack.c.h.b16 %v102
    %v436 = vunpack.c.l.b16 %v103
    %v437 = vunpack.c.h.b16 %v103
    %v438 = vunpack.c.l.b16 %v104
    %v439 = vunpack.c.h.b16 %v104
    %v440 = vunpack.c.l.b16 %v105
    %v441 = vunpack.c.h.b16 %v105
    %v442 = vunpack.c.l.b16 %v106
    %v443 = vunpack.c.h.b16 %v106
    %v444 = vunpack.c.l.b16 %v107
    %v445 = vunpack.c.h.b16 %v107
    %v446 = vunpack.c.l.b16 %v108
    %v447 = vunpack.c.h.b16 %v108
    %v448 = vunpack.c.l.b16 %v109
    %v449 = vunpack.c.h.b16 %v109
    %v450 = vunpack.c.l.b16 %v110
    %v451 = vunpack.c.h.b16 %v110
    %v452 = vunpack.c.l.b16 %v111
    %v453 = vunpack.c.h.b16 %v111
    %v454 = vunpack.c.l.b16 %v112
    %v455 = vunpack.c.h.b16 %v112
    %v456 = vunpack.c.l.b16 %v113
    %v457 = vunpack.c.h.b16 %v113
    %v458 = vunpack.c.l.b16 %v114
    %v459 = vunpack.c.h.b16 %v114
    %v460 = vunpack.c.l.b16 %v115
    %v461 = vunpack.c.h.b16 %v115
    %v462 = vunpack.c.l.b16 %v116
    %v463 = vunpack.c.h.b16 %v116
    %v464 = vunpack.c.l.b16 %v117
    %v465 = vunpack.c.h.b16 %v117
    %v466 = vunpack.c.l.b16 %v118
    %v467 = vunpack.c.h.b16 %v118
    %v468 = vunpack.c.l.b16 %v119
    %v469 = vunpack.c.h.b16 %v119
    %v470 = vunpack.c.l.b16 %v120
    %v471 = vunpack.c.h.b16 %v120
    %v472 = vunpack.c.l.b16 %v121
    %v473 = vunpack.c.h.b16 %v121
    %v474 = vunpack.c.l.b16 %v122
    %v475 = vunpack.c.h.b16 %v122
    %v476 = vunpack.c.l.b16 %v123
    %v477 = vunpack.c.h.b16 %v123
    %v478 = vunpack.c.l.b16 %v124
    %v479 = vunpack.c.h.b16 %v124
    %v480 = vunpack.c.l.b16 %v125
    %v481 = vunpack.c.h.b16 %v125
    %v482 = vunpack.c.l.b16 %v126
    %v483 = vunpack.c.h.b16 %v126
    %v484 = vunpack.c.l.b16 %v127
    %v485 = vunpack.c.h.b16 %v127
    %v486 = vunpack.c.l.b16 %v128
    %v487 = vunpack.c.h.b16 %v128
    %v488 = vunpack.c.l.b16 %v129
    %v489 = vunpack.c.h.b16 %v129
    %v490 = vunpack.c.l.b16 %v130
    %v491 = vunpack.c.h.b16 %v130
    %v492 = vunpack.c.l.b16 %v131
    %v493 = vunpack.c.h.b16 %v131
    %v494 = vunpack.c.l.b16 %v132
    %v495 = vunpack.c.h.b16 %v132
    %v496 = vunpack.c.l.b16 %v133
    %v497 = vunpack.c.h.b16 %v133
    %v498 = vunpack.c.l.b16 %v134
    %v499 = vunpack.c.h.b16 %v134
    %v500 = vunpack.c.l.b16 %v135
    %v501 = vunpack.c.h.b16 %v135
    %v502 = vunpack.c.l.b16 %v136
    %v503 = vunpack.c.h.b16 %v136
    %v504 = vunpack.c.l.b16 %v137
    %v505 = vunpack.c.h.b16 %v137
    %v506 = vunpack.c.l.b16 %v138
    %v507 = vunpack.c.h.b16 %v138
    %v508 = vunpack.c.l.b16 %v139
    %v509 = vunpack.c.h.b16 %v139
    %v510 = vunpack.c.l.b16 %v140
    %v511 = vunpack.c.h.b16 %v140
    %v512 = vunpack.c.l.b16 %v141
    %v513 = vunpack.c.h.b16 %v141
    %v514 = vunpack.c.l.b16 %v142
    %v515 = vunpack.c.h.b16 %v142
    %v516 = vunpack.c.l.b16 %v143
    %v517 = vunpack.c.h.b16 %v143
    %v518 = vunpack.c.l.b16 %v144
    %v519 = vunpack.c.h.b16 %v144
    %v520 = vunpack.c.l.b16 %v145
    %v521 = vunpack.c.h.b16 %v145
    %v522 = vunpack.c.l.b16 %v146
    %v523 = vunpack.c.h.b16 %v146
    %v524 = vunpack.c.l.b16 %v147
    %v525 = vunpack.c.h.b16 %v147
    %v526 = vunpack.c.l.b16 %v148
    %v527 = vunpack.c.h.b16 %v148
    %v528 = vunpack.c.l.b16 %v149
    %v529 = vunpack.c.h.b16 %v149
    %v530 = vunpack.c.l.b16 %v150
    %v531 = vunpack.c.h.b16 %v150
    %v532 = vunpack.c.l.b16 %v151
    %v533 = vunpack.c.h.b16 %v151
    %v534 = vunpack.c.l.b16 %v152
    %v535 = vunpack.c.h.b16 %v152
    %v536 = vunpack.c.l.b16 %v153
    %v537 = vunpack.c.h.b16 %v153
    %v538 = vunpack.c.l.b16 %v154
    %v539 = vunpack.c.h.b16 %v154
    %v540 = vunpack.c.l.b16 %v155
    %v541 = vunpack.c.h.b16 %v155
    %v542 = vunpack.c.l.b16 %v156
    %v543 = vunpack.c.h.b16 %v156
    %v544 = vunpack.c.l.b16 %v157
    %v545 = vunpack.c.h.b16 %v157
    %v546 = vunpack.c.l.b16 %v158
    %v547 = vunpack.c.h.b16 %v158
    %v548 = vunpack.c.l.b16 %v159
    %v549 = vunpack.c.h.b16 %v159
    %v550 = vunpack.c.l.b16 %v160
    %v551 = vunpack.c.h.b16 %v160
    %v552 = vunpack.c.l.b16 %v161
    %v553 = vunpack.c.h.b16 %v161
    %v554 = vunpack.c.l.b16 %v162
    %v555 = vunpack.c.h.b16 %v162
    %v556 = vunpack.c.l.b16 %v163
    %v557 = vunpack.c.h.b16 %v163
    %v558 = vunpack.c.l.b16 %v164
    %v559 = vunpack.c.h.b16 %v164
    %v560 = vunpack.c.l.b16 %v165
    %v561 = vunpack.c.h.b16 %v165
    %v562 = vunpack.c.l.b16 %v166
    %v563 = vunpack.c.h.b16 %v166
    %v564 = vunpack.c.l.b16 %v167
    %v565 = vunpack.c.h.b16 %v167
    %v566 = vunpack.c.l.b16 %v168
    %v567 = vunpack.c.h.b16 %v168
    %v568 = vunpack.c.l.b16 %v169
    %v569 = vunpack.c.h.b16 %v169
    %v570 = vunpack.c.l.b16 %v170
    %v571 = vunpack.c.h.b16 %v170
    %v572 = vunpack.c.l.b16 %v171
    %v573 = vunpack.c.h.b16 %v171
    %v574 = vunpack.c.l.b16 %v172
    %v575 = vunpack.c.h.b16 %v172
    %v576 = vunpack.c.l.b16 %v173
    %v577 = vunpack.c.h.b16 %v173
    %v578 = vunpack.c.l.b16 %v174
    %v579 = vunpack.c.h.b16 %v174
    %v580 = vunpack.c.l.b16 %v175
    %v581 = vunpack.c.h.b16 %v175
    %v582 = vunpack.c.l.b16 %v176
    %v583 = vunpack.c.h.b16 %v176
    %v584 = vunpack.c.l.b16 %v177
    %v585 = vunpack.c.h.b16 %v177
    %v586 = vunpack.c.l.b16 %v178
    %v587 = vunpack.c.h.b16 %v178
    %v588 = vunpack.c.l.b16 %v179
    %v589 = vunpack.c.h.b16 %v179
    %v590 = vunpack.c.l.b16 %v180
    %v591 = vunpack.c.h.b16 %v180
    %v592 = vunpack.c.l.b16 %v181
    %v593 = vunpack.c.h.b16 %v181
    %v594 = vunpack.c.l.b16 %v182
    %v595 = vunpack.c.h.b16 %v182
    %v596 = vunpack.c.l.b16 %v183
    %v597 = vunpack.c.h.b16 %v183
    %v598 = vunpack.c.l.b16 %v184
    %v599 = vunpack.c.h.b16 %v184
    %v600 = vunpack.c.l.b16 %v185
    %v601 = vunpack.c.h.b16 %v185
    %v602 = vunpack.c.l.b16 %v186
    %v603 = vunpack.c.h.b16 %v186
    %v604 = vunpack.c.l.b16 %v187
    %v605 = vunpack.c.h.b16 %v187
    %v606 = vunpack.c.l.b16 %v188
    %v607 = vunpack.c.h.b16 %v188
    %v608 = vunpack.c.l.b16 %v189
    %v609 = vunpack.c.h.b16 %v189
    %v610 = vpack.c.b16 %v358, %v354
    %v611 = vpack.c.b16 %v359, %v355
    %v612 = vpack.c.b16 %v360, %v356
    %v613 = vpack.c.b16 %v361, %v357
    %v614 = vpack.c.b16 %v366, %v362
    %v615 = vpack.c.b16 %v367, %v363
    %v616 = vpack.c.b16 %v368, %v364
    %v617 = vpack.c.b16 %v369, %v365
    %v618 = vpack.c.b16 %v374, %v370
    %v619 = vpack.c.b16 %v375, %v371
    %v620 = vpack.c.b16 %v376, %v372
    %v621 = vpack.c.b16 %v377, %v373
    %v622 = vpack.c.b16 %v382, %v378
    %v623 = vpack.c.b16 %v383, %v379
    %v624 = vpack.c.b16 %v384, %v380
    %v625 = vpack.c.b16 %v385, %v381
    %v626 = vpack.c.b16 %v390, %v386
    %v627 = vpack.c.b16 %v391, %v387
    %v628 = vpack.c.b16 %v392, %v388
    %v629 = vpack.c.b16 %v393, %v389
    %v630 = vpack.c.b16 %v398, %v394
    %v631 = vpack.c.b16 %v399, %v395
    %v632 = vpack.c.b16 %v400, %v396
    %v633 = vpack.c.b16 %v401, %v397
    %v634 = vpack.c.b16 %v406, %v402
    %v635 = vpack.c.b16 %v407, %v403
    %v636 = vpack.c.b16 %v408, %v404
    %v637 = vpack.c.b16 %v409, %v405
    %v638 = vpack.c.b16 %v414, %v410
    %v639 = vpack.c.b16 %v415, %v411
    %v640 = vpack.c.b16 %v416, %v412
    %v641 = vpack.c.b16 %v417, %v413
    %v642 = vpack.c.b16 %v422, %v418
    %v643 = vpack.c.b16 %v423, %v419
    %v644 = vpack.c.b16 %v424, %v420
    %v645 = vpack.c.b16 %v425, %v421
    %v646 = vpack.c.b16 %v430, %v426
    %v647 = vpack.c.b16 %v431, %v427
    %v648 = vpack.c.b16 %v432, %v428
    %v649 = vpack.c.b16 %v433, %v429
    %v650 = vpack.c.b16 %v438, %v434
    %v651 = vpack.c.b16 %v439, %v435
    %v652 = vpack.c.b16 %v440, %v436
    %v653 = vpack.c.b16 %v441, %v437
    %v654 = vpack.c.b16 %v446, %v442
    %v655 = vpack.c.b16 %v447, %v443
    %v656 = vpack.c.b16 %v448, %v444
    %v657 = vpack.c.b16 %v449, %v445
    %v658 = vpack.c.b16 %v454, %v450
    %v659 = vpack.c.b16 %v455, %v451
    %v660 = vpack.c.b16 %v456, %v452
    %v661 = vpack.c.b16 %v457, %v453
    %v662 = vpack.c.b16 %v462, %v458
    %v663 = vpack.c.b16 %v463, %v459
    %v664 = vpack.c.b16 %v464, %v460
    %v665 = vpack.c.b16 %v465, %v461
    %v666 = vpack.c.b16 %v470, %v466
    %v667 = vpack.c.b16 %v471, %v467
    %v668 = vpack.c.b16 %v472, %v468
    %v669 = vpack.c.b16 %v473, %v469
    %v670 = vpack.c.b16 %v478, %v474
    %v671 = vpack.c.b16 %v479, %v475
    %v672 = vpack.c.b16 %v480, %v476
    %v673 = vpack.c.b16 %v481, %v477
    %v674 = vpack.c.b16 %v486, %v482
    %v675 = vpack.c.b16 %v487, %v483
    %v676 = vpack.c.b16 %v488, %v484
    %v677 = vpack.c.b16 %v489, %v485
    %v678 = vpack.c.b16 %v494, %v490
    %v679 = vpack.c.b16 %v495, %v491
    %v680 = vpack.c.b16 %v496, %v492
    %v681 = vpack.c.b16 %v497, %v493
    %v682 = vpack.c.b16 %v502, %v498
    %v683 = vpack.c.b16 %v503, %v499
    %v684 = vpack.c.b16 %v504, %v500
    %v685 = vpack.c.b16 %v505, %v501
    %v686 = vpack.c.b16 %v510, %v506
    %v687 = vpack.c.b16 %v511, %v507
    %v688 = vpack.c.b16 %v512, %v508
    %v689 = vpack.c.b16 %v513, %v509
    %v690 = vpack.c.b16 %v518, %v514
    %v691 = vpack.c.b16 %v519, %v515
    %v692 = vpack.c.b16 %v520, %v516
    %v693 = vpack.c.b16 %v521, %v517
    %v694 = vpack.c.b16 %v526, %v522
    %v695 = vpack.c.b16 %v527, %v523
    %v696 = vpack.c.b16 %v528, %v524
    %v697 = vpack.c.b16 %v529, %v525
    %v698 = vpack.c.b16 %v534, %v530
    %v699 = vpack.c.b16 %v535, %v531
    %v700 = vpack.c.b16 %v536, %v532
    %v701 = vpack.c.b16 %v537, %v533
    %v702 = vpack.c.b16 %v542, %v538
    %v703 = vpack.c.b16 %v543, %v539
    %v704 = vpack.c.b16 %v544, %v540
    %v705 = vpack.c.b16 %v545, %v541
    %v706 = vpack.c.b16 %v550, %v546
    %v707 = vpack.c.b16 %v551, %v547
    %v708 = vpack.c.b16 %v552, %v548
    %v709 = vpack.c.b16 %v553, %v549
    %v710 = vpack.c.b16 %v558, %v554
    %v711 = vpack.c.b16 %v559, %v555
    %v712 = vpack.c.b16 %v560, %v556
    %v713 = vpack.c.b16 %v561, %v557
    %v714 = vpack.c.b16 %v566, %v562
    %v715 = vpack.c.b16 %v567, %v563
    %v716 = vpack.c.b16 %v568, %v564
    %v717 = vpack.c.b16 %v569, %v565
    %v718 = vpack.c.b16 %v574, %v570
    %v719 = vpack.c.b16 %v575, %v571
    %v720 = vpack.c.b16 %v576, %v572
    %v721 = vpack.c.b16 %v577, %v573
    %v722 = vpack.c.b16 %v582, %v578
    %v723 = vpack.c.b16 %v583, %v579
    %v724 = vpack.c.b16 %v584, %v580
    %v725 = vpack.c.b16 %v585, %v581
    %v726 = vpack.c.b16 %v590, %v586
    %v727 = vpack.c.b16 %v591, %v587
    %v728 = vpack.c.b16 %v592, %v588
    %v729 = vpack.c.b16 %v593, %v589
    %v730 = vpack.c.b16 %v598, %v594
    %v731 = vpack.c.b16 %v599, %v595
    %v732 = vpack.c.b16 %v600, %v596
    %v733 = vpack.c.b16 %v601, %v597
    %v734 = vpack.c.b16 %v606, %v602
    %v735 = vpack.c.b16 %v607, %v603
    %v736 = vpack.c.b16 %v608, %v604
    %v737 = vpack.c.b16 %v609, %v605
    %866 = vmatprep.subr.bf16.mxu0 %v611
    %867 = vmatpush1.bf16.msra.mxu0 %v610
    %868 = vmatprep.subr.bf16.mxu0 %v615
    %869 = vmatpush1.bf16.msra.mxu0 %v614
    %870 = vmatprep.subr.bf16.mxu0 %v619
    %871 = vmatpush1.bf16.msra.mxu0 %v618
    %872 = vmatprep.subr.bf16.mxu0 %v623
    %873 = vmatpush1.bf16.msra.mxu0 %v622
    %874 = vmatprep.subr.bf16.mxu0 %v627
    %875 = vmatpush1.bf16.msra.mxu0 %v626
    %876 = vmatprep.subr.bf16.mxu0 %v631
    %877 = vmatpush1.bf16.msra.mxu0 %v630
    %878 = vmatprep.subr.bf16.mxu0 %v635
    %879 = vmatpush1.bf16.msra.mxu0 %v634
    %880 = vmatprep.subr.bf16.mxu0 %v639
    %881 = vmatpush1.bf16.msra.mxu0 %v638
    %882 = vmatprep.subr.bf16.mxu0 %v643
    %883 = vmatpush1.bf16.msra.mxu0 %v642
    %884 = vmatprep.subr.bf16.mxu0 %v647
    %885 = vmatpush1.bf16.msra.mxu0 %v646
    %886 = vmatprep.subr.bf16.mxu0 %v651
    %887 = vmatpush1.bf16.msra.mxu0 %v650
    %888 = vmatprep.subr.bf16.mxu0 %v655
    %889 = vmatpush1.bf16.msra.mxu0 %v654
    %890 = vmatprep.subr.bf16.mxu0 %v659
    %891 = vmatpush1.bf16.msra.mxu0 %v658
    %892 = vmatprep.subr.bf16.mxu0 %v663
    %893 = vmatpush1.bf16.msra.mxu0 %v662
    %894 = vmatprep.subr.bf16.mxu0 %v667
    %895 = vmatpush1.bf16.msra.mxu0 %v666
    %896 = vmatprep.subr.bf16.mxu0 %v671
    %897 = vmatpush1.bf16.msra.mxu0 %v670
    %898 = vmatprep.mubr.bf16.mxu0 %v219
    %899 = vmatmul.mubr.bf16.gmra.mrb[0].mxu0 %v218
    %v900 = vpop.f32.mrb[0].mxu0
    %v901 = vadd.f32 %v195, %v900
    %v902 = vpop.f32.mrb[0].mxu0
    %v903 = vadd.f32 %v199, %v902
    %v904 = vpop.f32.mrb[0].mxu0
    %v905 = vpop.f32.mrb[0].mxu0
    %906 = vdwg.mxu0
    %907 = vmatprep.subr.bf16.mxu0 %v675
    %908 = vmatpush1.bf16.msra.mxu0 %v674
    %909 = vmatprep.subr.bf16.mxu0 %v679
    %910 = vmatpush1.bf16.msra.mxu0 %v678
    %911 = vmatprep.subr.bf16.mxu0 %v683
    %912 = vmatpush1.bf16.msra.mxu0 %v682
    %913 = vmatprep.subr.bf16.mxu0 %v687
    %914 = vmatpush1.bf16.msra.mxu0 %v686
    %915 = vmatprep.subr.bf16.mxu0 %v691
    %916 = vmatpush1.bf16.msra.mxu0 %v690
    %917 = vmatprep.subr.bf16.mxu0 %v695
    %918 = vmatpush1.bf16.msra.mxu0 %v694
    %919 = vmatprep.subr.bf16.mxu0 %v699
    %920 = vmatpush1.bf16.msra.mxu0 %v698
    %921 = vmatprep.subr.bf16.mxu0 %v703
    %922 = vmatpush1.bf16.msra.mxu0 %v702
    %923 = vmatprep.subr.bf16.mxu0 %v707
    %924 = vmatpush1.bf16.msra.mxu0 %v706
    %925 = vmatprep.subr.bf16.mxu0 %v711
    %926 = vmatpush1.bf16.msra.mxu0 %v710
    %927 = vmatprep.subr.bf16.mxu0 %v715
    %928 = vmatpush1.bf16.msra.mxu0 %v714
    %929 = vmatprep.subr.bf16.mxu0 %v719
    %930 = vmatpush1.bf16.msra.mxu0 %v718
    %931 = vmatprep.subr.bf16.mxu0 %v723
    %932 = vmatpush1.bf16.msra.mxu0 %v722
    %933 = vmatprep.subr.bf16.mxu0 %v727
    %934 = vmatpush1.bf16.msra.mxu0 %v726
    %935 = vmatprep.subr.bf16.mxu0 %v731
    %936 = vmatpush1.bf16.msra.mxu0 %v730
    %937 = vmatprep.subr.bf16.mxu0 %v735
    %938 = vmatpush1.bf16.msra.mxu0 %v734
    %939 = vmatprep.mubr.bf16.mxu0 %v221
    %940 = vmatmul.mubr.bf16.gmra.mrb[0].mxu0 %v220
    %v941 = vpop.f32.mrb[0].mxu0
    %v942 = vadd.f32 %v901, %v941
    %v943 = vpop.f32.mrb[0].mxu0
    %v944 = vadd.f32 %v903, %v943
    %v945 = vpop.f32.mrb[0].mxu0
    %v946 = vpop.f32.mrb[0].mxu0
    %947 = vdwg.mxu0
    %948 = vmatprep.subr.bf16.mxu0 %v613
    %949 = vmatpush1.bf16.msra.mxu0 %v612
    %950 = vmatprep.subr.bf16.mxu0 %v617
    %951 = vmatpush1.bf16.msra.mxu0 %v616
    %952 = vmatprep.subr.bf16.mxu0 %v621
    %953 = vmatpush1.bf16.msra.mxu0 %v620
    %954 = vmatprep.subr.bf16.mxu0 %v625
    %955 = vmatpush1.bf16.msra.mxu0 %v624
    %956 = vmatprep.subr.bf16.mxu0 %v629
    %957 = vmatpush1.bf16.msra.mxu0 %v628
    %958 = vmatprep.subr.bf16.mxu0 %v633
    %959 = vmatpush1.bf16.msra.mxu0 %v632
    %960 = vmatprep.subr.bf16.mxu0 %v637
    %961 = vmatpush1.bf16.msra.mxu0 %v636
    %962 = vmatprep.subr.bf16.mxu0 %v641
    %963 = vmatpush1.bf16.msra.mxu0 %v640
    %964 = vmatprep.subr.bf16.mxu0 %v645
    %965 = vmatpush1.bf16.msra.mxu0 %v644
    %966 = vmatprep.subr.bf16.mxu0 %v649
    %967 = vmatpush1.bf16.msra.mxu0 %v648
    %968 = vmatprep.subr.bf16.mxu0 %v653
    %969 = vmatpush1.bf16.msra.mxu0 %v652
    %970 = vmatprep.subr.bf16.mxu0 %v657
    %971 = vmatpush1.bf16.msra.mxu0 %v656
    %972 = vmatprep.subr.bf16.mxu0 %v661
    %973 = vmatpush1.bf16.msra.mxu0 %v660
    %974 = vmatprep.subr.bf16.mxu0 %v665
    %975 = vmatpush1.bf16.msra.mxu0 %v664
    %976 = vmatprep.subr.bf16.mxu0 %v669
    %977 = vmatpush1.bf16.msra.mxu0 %v668
    %978 = vmatprep.subr.bf16.mxu0 %v673
    %979 = vmatpush1.bf16.msra.mxu0 %v672
    %980 = vmatprep.mubr.bf16.mxu0 %v219
    %981 = vmatmul.mubr.bf16.gmra.mrb[0].mxu0 %v218
    %v982 = vpop.f32.mrb[0].mxu0
    %v983 = vadd.f32 %v203, %v982
    %v984 = vpop.f32.mrb[0].mxu0
    %v985 = vadd.f32 %v207, %v984
    %v986 = vpop.f32.mrb[0].mxu0
    %v987 = vpop.f32.mrb[0].mxu0
    %988 = vdwg.mxu0
    %989 = vmatprep.subr.bf16.mxu0 %v677
    %990 = vmatpush1.bf16.msra.mxu0 %v676
    %991 = vmatprep.subr.bf16.mxu0 %v681
    %992 = vmatpush1.bf16.msra.mxu0 %v680
    %993 = vmatprep.subr.bf16.mxu0 %v685
    %994 = vmatpush1.bf16.msra.mxu0 %v684
    %995 = vmatprep.subr.bf16.mxu0 %v689
    %996 = vmatpush1.bf16.msra.mxu0 %v688
    %997 = vmatprep.subr.bf16.mxu0 %v693
    %998 = vmatpush1.bf16.msra.mxu0 %v692
    %999 = vmatprep.subr.bf16.mxu0 %v697
    %1000 = vmatpush1.bf16.msra.mxu0 %v696
    %1001 = vmatprep.subr.bf16.mxu0 %v701
    %1002 = vmatpush1.bf16.msra.mxu0 %v700
    %1003 = vmatprep.subr.bf16.mxu0 %v705
    %1004 = vmatpush1.bf16.msra.mxu0 %v704
    %1005 = vmatprep.subr.bf16.mxu0 %v709
    %1006 = vmatpush1.bf16.msra.mxu0 %v708
    %1007 = vmatprep.subr.bf16.mxu0 %v713
    %1008 = vmatpush1.bf16.msra.mxu0 %v712
    %1009 = vmatprep.subr.bf16.mxu0 %v717
    %1010 = vmatpush1.bf16.msra.mxu0 %v716
    %1011 = vmatprep.subr.bf16.mxu0 %v721
    %1012 = vmatpush1.bf16.msra.mxu0 %v720
    %1013 = vmatprep.subr.bf16.mxu0 %v725
    %1014 = vmatpush1.bf16.msra.mxu0 %v724
    %1015 = vmatprep.subr.bf16.mxu0 %v729
    %1016 = vmatpush1.bf16.msra.mxu0 %v728
    %1017 = vmatprep.subr.bf16.mxu0 %v733
    %1018 = vmatpush1.bf16.msra.mxu0 %v732
    %1019 = vmatprep.subr.bf16.mxu0 %v737
    %1020 = vmatpush1.bf16.msra.mxu0 %v736
    %1021 = vmatprep.mubr.bf16.mxu0 %v221
    %1022 = vmatmul.mubr.bf16.gmra.mrb[0].mxu0 %v220
    %v1023 = vpop.f32.mrb[0].mxu0
    %v1024 = vadd.f32 %v983, %v1023
    %v1025 = vpop.f32.mrb[0].mxu0
    %v1026 = vadd.f32 %v985, %v1025
    %v1027 = vpop.f32.mrb[0].mxu0
    %v1028 = vpop.f32.mrb[0].mxu0
    %1029 = vdwg.mxu0
    %v1030 = vmax.f32 %v942, 0.0
    %v1031 = vmax.f32 %v944, 0.0
    %v1032 = vmax.f32 %v1024, 0.0
    %v1033 = vmax.f32 %v1026, 0.0
    %v1034 = vpack.c.bf16 %v1030, %v1030
    %v1035 = vpack.c.bf16 %v1031, %v1031
    %v1036 = vpack.c.bf16 %v1032, %v1032
    %v1037 = vpack.c.bf16 %v1033, %v1033
    %v1038 = vld [vmem:[#allocation7] sm:$0xff]
    %v1039 = vld [vmem:[#allocation7 + $0x8] sm:$0xff]
    %v1040 = vld [vmem:[#allocation7 + $0x10] sm:$0xff]
    %v1041 = vld [vmem:[#allocation7 + $0x18] sm:$0xff]
    %v1042 = vld [vmem:[#allocation7 + $0x20] sm:$0xff]
    %v1043 = vld [vmem:[#allocation7 + $0x28] sm:$0xff]
    %v1044 = vld [vmem:[#allocation7 + $0x30] sm:$0xff]
    %v1045 = vld [vmem:[#allocation7 + $0x38] sm:$0xff]
    %v1046 = vld [vmem:[#allocation7 + $0x40] sm:$0xff]
    %v1047 = vld [vmem:[#allocation7 + $0x48] sm:$0xff]
    %v1048 = vld [vmem:[#allocation7 + $0x50] sm:$0xff]
    %v1049 = vld [vmem:[#allocation7 + $0x58] sm:$0xff]
    %v1050 = vld [vmem:[#allocation7 + $0x60] sm:$0xff]
    %v1051 = vld [vmem:[#allocation7 + $0x68] sm:$0xff]
    %v1052 = vld [vmem:[#allocation7 + $0x70] sm:$0xff]
    %v1053 = vld [vmem:[#allocation7 + $0x78] sm:$0xff]
    %v1054 = vld [vmem:[#allocation7 + $0x80] sm:$0xff]
    %v1055 = vld [vmem:[#allocation7 + $0x88] sm:$0xff]
    %v1056 = vld [vmem:[#allocation7 + $0x90] sm:$0xff]
    %v1057 = vld [vmem:[#allocation7 + $0x98] sm:$0xff]
    %v1058 = vld [vmem:[#allocation7 + $0xa0] sm:$0xff]
    %v1059 = vld [vmem:[#allocation7 + $0xa8] sm:$0xff]
    %v1060 = vld [vmem:[#allocation7 + $0xb0] sm:$0xff]
    %v1061 = vld [vmem:[#allocation7 + $0xb8] sm:$0xff]
    %v1062 = vld [vmem:[#allocation7 + $0xc0] sm:$0xff]
    %v1063 = vld [vmem:[#allocation7 + $0xc8] sm:$0xff]
    %v1064 = vld [vmem:[#allocation7 + $0xd0] sm:$0xff]
    %v1065 = vld [vmem:[#allocation7 + $0xd8] sm:$0xff]
    %v1066 = vld [vmem:[#allocation7 + $0xe0] sm:$0xff]
    %v1067 = vld [vmem:[#allocation7 + $0xe8] sm:$0xff]
    %v1068 = vld [vmem:[#allocation7 + $0xf0] sm:$0xff]
    %v1069 = vld [vmem:[#allocation7 + $0xf8] sm:$0xff]
    %v1070 = vld [vmem:[#allocation7 + $0x100] sm:$0xff]
    %v1071 = vld [vmem:[#allocation7 + $0x108] sm:$0xff]
    %v1072 = vld [vmem:[#allocation7 + $0x110] sm:$0xff]
    %v1073 = vld [vmem:[#allocation7 + $0x118] sm:$0xff]
    %v1074 = vld [vmem:[#allocation7 + $0x120] sm:$0xff]
    %v1075 = vld [vmem:[#allocation7 + $0x128] sm:$0xff]
    %v1076 = vld [vmem:[#allocation7 + $0x130] sm:$0xff]
    %v1077 = vld [vmem:[#allocation7 + $0x138] sm:$0xff]
    %v1078 = vld [vmem:[#allocation7 + $0x140] sm:$0xff]
    %v1079 = vld [vmem:[#allocation7 + $0x148] sm:$0xff]
    %v1080 = vld [vmem:[#allocation7 + $0x150] sm:$0xff]
    %v1081 = vld [vmem:[#allocation7 + $0x158] sm:$0xff]
    %v1082 = vld [vmem:[#allocation7 + $0x160] sm:$0xff]
    %v1083 = vld [vmem:[#allocation7 + $0x168] sm:$0xff]
    %v1084 = vld [vmem:[#allocation7 + $0x170] sm:$0xff]
    %v1085 = vld [vmem:[#allocation7 + $0x178] sm:$0xff]
    %v1086 = vld [vmem:[#allocation7 + $0x180] sm:$0xff]
    %v1087 = vld [vmem:[#allocation7 + $0x188] sm:$0xff]
    %v1088 = vld [vmem:[#allocation7 + $0x190] sm:$0xff]
    %v1089 = vld [vmem:[#allocation7 + $0x198] sm:$0xff]
    %v1090 = vld [vmem:[#allocation7 + $0x1a0] sm:$0xff]
    %v1091 = vld [vmem:[#allocation7 + $0x1a8] sm:$0xff]
    %v1092 = vld [vmem:[#allocation7 + $0x1b0] sm:$0xff]
    %v1093 = vld [vmem:[#allocation7 + $0x1b8] sm:$0xff]
    %v1094 = vld [vmem:[#allocation7 + $0x1c0] sm:$0xff]
    %v1095 = vld [vmem:[#allocation7 + $0x1c8] sm:$0xff]
    %v1096 = vld [vmem:[#allocation7 + $0x1d0] sm:$0xff]
    %v1097 = vld [vmem:[#allocation7 + $0x1d8] sm:$0xff]
    %v1098 = vld [vmem:[#allocation7 + $0x1e0] sm:$0xff]
    %v1099 = vld [vmem:[#allocation7 + $0x1e8] sm:$0xff]
    %v1100 = vld [vmem:[#allocation7 + $0x1f0] sm:$0xff]
    %v1101 = vld [vmem:[#allocation7 + $0x1f8] sm:$0xff]
    %v1102 = vld [vmem:[%s4] sm:$0x3]
    %v1104 = vlaneseq
    %v1105 = vshrl.u32 %v1104, 7
    %v1106 = vsub.s32 0, %v1105
    %v1107 = vrot.slane %v1102, %v1106
    %v1108 = vlaneseq
    %v1109 = vshrl.u32 %v1108, 7
    %v1110 = vsub.s32 1, %v1109
    %v1111 = vrot.slane %v1102, %v1110
    %v1178 = vunpack.c.l.b16 %v1038
    %v1179 = vunpack.c.h.b16 %v1038
    %v1180 = vunpack.c.l.b16 %v1039
    %v1181 = vunpack.c.h.b16 %v1039
    %v1182 = vunpack.c.l.b16 %v1040
    %v1183 = vunpack.c.h.b16 %v1040
    %v1184 = vunpack.c.l.b16 %v1041
    %v1185 = vunpack.c.h.b16 %v1041
    %v1186 = vunpack.c.l.b16 %v1042
    %v1187 = vunpack.c.h.b16 %v1042
    %v1188 = vunpack.c.l.b16 %v1043
    %v1189 = vunpack.c.h.b16 %v1043
    %v1190 = vunpack.c.l.b16 %v1044
    %v1191 = vunpack.c.h.b16 %v1044
    %v1192 = vunpack.c.l.b16 %v1045
    %v1193 = vunpack.c.h.b16 %v1045
    %v1194 = vunpack.c.l.b16 %v1046
    %v1195 = vunpack.c.h.b16 %v1046
    %v1196 = vunpack.c.l.b16 %v1047
    %v1197 = vunpack.c.h.b16 %v1047
    %v1198 = vunpack.c.l.b16 %v1048
    %v1199 = vunpack.c.h.b16 %v1048
    %v1200 = vunpack.c.l.b16 %v1049
    %v1201 = vunpack.c.h.b16 %v1049
    %v1202 = vunpack.c.l.b16 %v1050
    %v1203 = vunpack.c.h.b16 %v1050
    %v1204 = vunpack.c.l.b16 %v1051
    %v1205 = vunpack.c.h.b16 %v1051
    %v1206 = vunpack.c.l.b16 %v1052
    %v1207 = vunpack.c.h.b16 %v1052
    %v1208 = vunpack.c.l.b16 %v1053
    %v1209 = vunpack.c.h.b16 %v1053
    %v1210 = vunpack.c.l.b16 %v1054
    %v1211 = vunpack.c.h.b16 %v1054
    %v1212 = vunpack.c.l.b16 %v1055
    %v1213 = vunpack.c.h.b16 %v1055
    %v1214 = vunpack.c.l.b16 %v1056
    %v1215 = vunpack.c.h.b16 %v1056
    %v1216 = vunpack.c.l.b16 %v1057
    %v1217 = vunpack.c.h.b16 %v1057
    %v1218 = vunpack.c.l.b16 %v1058
    %v1219 = vunpack.c.h.b16 %v1058
    %v1220 = vunpack.c.l.b16 %v1059
    %v1221 = vunpack.c.h.b16 %v1059
    %v1222 = vunpack.c.l.b16 %v1060
    %v1223 = vunpack.c.h.b16 %v1060
    %v1224 = vunpack.c.l.b16 %v1061
    %v1225 = vunpack.c.h.b16 %v1061
    %v1226 = vunpack.c.l.b16 %v1062
    %v1227 = vunpack.c.h.b16 %v1062
    %v1228 = vunpack.c.l.b16 %v1063
    %v1229 = vunpack.c.h.b16 %v1063
    %v1230 = vunpack.c.l.b16 %v1064
    %v1231 = vunpack.c.h.b16 %v1064
    %v1232 = vunpack.c.l.b16 %v1065
    %v1233 = vunpack.c.h.b16 %v1065
    %v1234 = vunpack.c.l.b16 %v1066
    %v1235 = vunpack.c.h.b16 %v1066
    %v1236 = vunpack.c.l.b16 %v1067
    %v1237 = vunpack.c.h.b16 %v1067
    %v1238 = vunpack.c.l.b16 %v1068
    %v1239 = vunpack.c.h.b16 %v1068
    %v1240 = vunpack.c.l.b16 %v1069
    %v1241 = vunpack.c.h.b16 %v1069
    %v1242 = vunpack.c.l.b16 %v1070
    %v1243 = vunpack.c.h.b16 %v1070
    %v1244 = vunpack.c.l.b16 %v1071
    %v1245 = vunpack.c.h.b16 %v1071
    %v1246 = vunpack.c.l.b16 %v1072
    %v1247 = vunpack.c.h.b16 %v1072
    %v1248 = vunpack.c.l.b16 %v1073
    %v1249 = vunpack.c.h.b16 %v1073
    %v1250 = vunpack.c.l.b16 %v1074
    %v1251 = vunpack.c.h.b16 %v1074
    %v1252 = vunpack.c.l.b16 %v1075
    %v1253 = vunpack.c.h.b16 %v1075
    %v1254 = vunpack.c.l.b16 %v1076
    %v1255 = vunpack.c.h.b16 %v1076
    %v1256 = vunpack.c.l.b16 %v1077
    %v1257 = vunpack.c.h.b16 %v1077
    %v1258 = vunpack.c.l.b16 %v1078
    %v1259 = vunpack.c.h.b16 %v1078
    %v1260 = vunpack.c.l.b16 %v1079
    %v1261 = vunpack.c.h.b16 %v1079
    %v1262 = vunpack.c.l.b16 %v1080
    %v1263 = vunpack.c.h.b16 %v1080
    %v1264 = vunpack.c.l.b16 %v1081
    %v1265 = vunpack.c.h.b16 %v1081
    %v1266 = vunpack.c.l.b16 %v1082
    %v1267 = vunpack.c.h.b16 %v1082
    %v1268 = vunpack.c.l.b16 %v1083
    %v1269 = vunpack.c.h.b16 %v1083
    %v1270 = vunpack.c.l.b16 %v1084
    %v1271 = vunpack.c.h.b16 %v1084
    %v1272 = vunpack.c.l.b16 %v1085
    %v1273 = vunpack.c.h.b16 %v1085
    %v1274 = vunpack.c.l.b16 %v1086
    %v1275 = vunpack.c.h.b16 %v1086
    %v1276 = vunpack.c.l.b16 %v1087
    %v1277 = vunpack.c.h.b16 %v1087
    %v1278 = vunpack.c.l.b16 %v1088
    %v1279 = vunpack.c.h.b16 %v1088
    %v1280 = vunpack.c.l.b16 %v1089
    %v1281 = vunpack.c.h.b16 %v1089
    %v1282 = vunpack.c.l.b16 %v1090
    %v1283 = vunpack.c.h.b16 %v1090
    %v1284 = vunpack.c.l.b16 %v1091
    %v1285 = vunpack.c.h.b16 %v1091
    %v1286 = vunpack.c.l.b16 %v1092
    %v1287 = vunpack.c.h.b16 %v1092
    %v1288 = vunpack.c.l.b16 %v1093
    %v1289 = vunpack.c.h.b16 %v1093
    %v1290 = vunpack.c.l.b16 %v1094
    %v1291 = vunpack.c.h.b16 %v1094
    %v1292 = vunpack.c.l.b16 %v1095
    %v1293 = vunpack.c.h.b16 %v1095
    %v1294 = vunpack.c.l.b16 %v1096
    %v1295 = vunpack.c.h.b16 %v1096
    %v1296 = vunpack.c.l.b16 %v1097
    %v1297 = vunpack.c.h.b16 %v1097
    %v1298 = vunpack.c.l.b16 %v1098
    %v1299 = vunpack.c.h.b16 %v1098
    %v1300 = vunpack.c.l.b16 %v1099
    %v1301 = vunpack.c.h.b16 %v1099
    %v1302 = vunpack.c.l.b16 %v1100
    %v1303 = vunpack.c.h.b16 %v1100
    %v1304 = vunpack.c.l.b16 %v1101
    %v1305 = vunpack.c.h.b16 %v1101
    %v1306 = vpack.c.b16 %v1180, %v1178
    %v1307 = vpack.c.b16 %v1181, %v1179
    %v1308 = vpack.c.b16 %v1184, %v1182
    %v1309 = vpack.c.b16 %v1185, %v1183
    %v1310 = vpack.c.b16 %v1188, %v1186
    %v1311 = vpack.c.b16 %v1189, %v1187
    %v1312 = vpack.c.b16 %v1192, %v1190
    %v1313 = vpack.c.b16 %v1193, %v1191
    %v1314 = vpack.c.b16 %v1196, %v1194
    %v1315 = vpack.c.b16 %v1197, %v1195
    %v1316 = vpack.c.b16 %v1200, %v1198
    %v1317 = vpack.c.b16 %v1201, %v1199
    %v1318 = vpack.c.b16 %v1204, %v1202
    %v1319 = vpack.c.b16 %v1205, %v1203
    %v1320 = vpack.c.b16 %v1208, %v1206
    %v1321 = vpack.c.b16 %v1209, %v1207
    %v1322 = vpack.c.b16 %v1212, %v1210
    %v1323 = vpack.c.b16 %v1213, %v1211
    %v1324 = vpack.c.b16 %v1216, %v1214
    %v1325 = vpack.c.b16 %v1217, %v1215
    %v1326 = vpack.c.b16 %v1220, %v1218
    %v1327 = vpack.c.b16 %v1221, %v1219
    %v1328 = vpack.c.b16 %v1224, %v1222
    %v1329 = vpack.c.b16 %v1225, %v1223
    %v1330 = vpack.c.b16 %v1228, %v1226
    %v1331 = vpack.c.b16 %v1229, %v1227
    %v1332 = vpack.c.b16 %v1232, %v1230
    %v1333 = vpack.c.b16 %v1233, %v1231
    %v1334 = vpack.c.b16 %v1236, %v1234
    %v1335 = vpack.c.b16 %v1237, %v1235
    %v1336 = vpack.c.b16 %v1240, %v1238
    %v1337 = vpack.c.b16 %v1241, %v1239
    %v1338 = vpack.c.b16 %v1244, %v1242
    %v1339 = vpack.c.b16 %v1245, %v1243
    %v1340 = vpack.c.b16 %v1248, %v1246
    %v1341 = vpack.c.b16 %v1249, %v1247
    %v1342 = vpack.c.b16 %v1252, %v1250
    %v1343 = vpack.c.b16 %v1253, %v1251
    %v1344 = vpack.c.b16 %v1256, %v1254
    %v1345 = vpack.c.b16 %v1257, %v1255
    %v1346 = vpack.c.b16 %v1260, %v1258
    %v1347 = vpack.c.b16 %v1261, %v1259
    %v1348 = vpack.c.b16 %v1264, %v1262
    %v1349 = vpack.c.b16 %v1265, %v1263
    %v1350 = vpack.c.b16 %v1268, %v1266
    %v1351 = vpack.c.b16 %v1269, %v1267
    %v1352 = vpack.c.b16 %v1272, %v1270
    %v1353 = vpack.c.b16 %v1273, %v1271
    %v1354 = vpack.c.b16 %v1276, %v1274
    %v1355 = vpack.c.b16 %v1277, %v1275
    %v1356 = vpack.c.b16 %v1280, %v1278
    %v1357 = vpack.c.b16 %v1281, %v1279
    %v1358 = vpack.c.b16 %v1284, %v1282
    %v1359 = vpack.c.b16 %v1285, %v1283
    %v1360 = vpack.c.b16 %v1288, %v1286
    %v1361 = vpack.c.b16 %v1289, %v1287
    %v1362 = vpack.c.b16 %v1292, %v1290
    %v1363 = vpack.c.b16 %v1293, %v1291
    %v1364 = vpack.c.b16 %v1296, %v1294
    %v1365 = vpack.c.b16 %v1297, %v1295
    %v1366 = vpack.c.b16 %v1300, %v1298
    %v1367 = vpack.c.b16 %v1301, %v1299
    %v1368 = vpack.c.b16 %v1304, %v1302
    %v1369 = vpack.c.b16 %v1305, %v1303
    %1434 = vmatprep.subr.bf16.mxu0 %v1307
    %1435 = vmatpush1.bf16.msra.mxu0 %v1306
    %1436 = vmatprep.subr.bf16.mxu0 %v1309
    %1437 = vmatpush1.bf16.msra.mxu0 %v1308
    %1438 = vmatprep.subr.bf16.mxu0 %v1311
    %1439 = vmatpush1.bf16.msra.mxu0 %v1310
    %1440 = vmatprep.subr.bf16.mxu0 %v1313
    %1441 = vmatpush1.bf16.msra.mxu0 %v1312
    %1442 = vmatprep.subr.bf16.mxu0 %v1315
    %1443 = vmatpush1.bf16.msra.mxu0 %v1314
    %1444 = vmatprep.subr.bf16.mxu0 %v1317
    %1445 = vmatpush1.bf16.msra.mxu0 %v1316
    %1446 = vmatprep.subr.bf16.mxu0 %v1319
    %1447 = vmatpush1.bf16.msra.mxu0 %v1318
    %1448 = vmatprep.subr.bf16.mxu0 %v1321
    %1449 = vmatpush1.bf16.msra.mxu0 %v1320
    %1450 = vmatprep.subr.bf16.mxu0 %v1323
    %1451 = vmatpush1.bf16.msra.mxu0 %v1322
    %1452 = vmatprep.subr.bf16.mxu0 %v1325
    %1453 = vmatpush1.bf16.msra.mxu0 %v1324
    %1454 = vmatprep.subr.bf16.mxu0 %v1327
    %1455 = vmatpush1.bf16.msra.mxu0 %v1326
    %1456 = vmatprep.subr.bf16.mxu0 %v1329
    %1457 = vmatpush1.bf16.msra.mxu0 %v1328
    %1458 = vmatprep.subr.bf16.mxu0 %v1331
    %1459 = vmatpush1.bf16.msra.mxu0 %v1330
    %1460 = vmatprep.subr.bf16.mxu0 %v1333
    %1461 = vmatpush1.bf16.msra.mxu0 %v1332
    %1462 = vmatprep.subr.bf16.mxu0 %v1335
    %1463 = vmatpush1.bf16.msra.mxu0 %v1334
    %1464 = vmatprep.subr.bf16.mxu0 %v1337
    %1465 = vmatpush1.bf16.msra.mxu0 %v1336
    %1466 = vmatprep.mubr.bf16.mxu0 %v1035
    %1467 = vmatmul.mubr.bf16.gmra.mrb[0].mxu0 %v1034
    %v1468 = vpop.f32.mrb[0].mxu0
    %v1469 = vadd.f32 %v1107, %v1468
    %v1470 = vpop.f32.mrb[0].mxu0
    %v1471 = vadd.f32 %v1111, %v1470
    %v1472 = vpop.f32.mrb[0].mxu0
    %v1473 = vpop.f32.mrb[0].mxu0
    %1474 = vdwg.mxu0
    %1475 = vmatprep.subr.bf16.mxu0 %v1339
    %1476 = vmatpush1.bf16.msra.mxu0 %v1338
    %1477 = vmatprep.subr.bf16.mxu0 %v1341
    %1478 = vmatpush1.bf16.msra.mxu0 %v1340
    %1479 = vmatprep.subr.bf16.mxu0 %v1343
    %1480 = vmatpush1.bf16.msra.mxu0 %v1342
    %1481 = vmatprep.subr.bf16.mxu0 %v1345
    %1482 = vmatpush1.bf16.msra.mxu0 %v1344
    %1483 = vmatprep.subr.bf16.mxu0 %v1347
    %1484 = vmatpush1.bf16.msra.mxu0 %v1346
    %1485 = vmatprep.subr.bf16.mxu0 %v1349
    %1486 = vmatpush1.bf16.msra.mxu0 %v1348
    %1487 = vmatprep.subr.bf16.mxu0 %v1351
    %1488 = vmatpush1.bf16.msra.mxu0 %v1350
    %1489 = vmatprep.subr.bf16.mxu0 %v1353
    %1490 = vmatpush1.bf16.msra.mxu0 %v1352
    %1491 = vmatprep.subr.bf16.mxu0 %v1355
    %1492 = vmatpush1.bf16.msra.mxu0 %v1354
    %1493 = vmatprep.subr.bf16.mxu0 %v1357
    %1494 = vmatpush1.bf16.msra.mxu0 %v1356
    %1495 = vmatprep.subr.bf16.mxu0 %v1359
    %1496 = vmatpush1.bf16.msra.mxu0 %v1358
    %1497 = vmatprep.subr.bf16.mxu0 %v1361
    %1498 = vmatpush1.bf16.msra.mxu0 %v1360
    %1499 = vmatprep.subr.bf16.mxu0 %v1363
    %1500 = vmatpush1.bf16.msra.mxu0 %v1362
    %1501 = vmatprep.subr.bf16.mxu0 %v1365
    %1502 = vmatpush1.bf16.msra.mxu0 %v1364
    %1503 = vmatprep.subr.bf16.mxu0 %v1367
    %1504 = vmatpush1.bf16.msra.mxu0 %v1366
    %1505 = vmatprep.subr.bf16.mxu0 %v1369
    %1506 = vmatpush1.bf16.msra.mxu0 %v1368
    %1507 = vmatprep.mubr.bf16.mxu0 %v1037
    %1508 = vmatmul.mubr.bf16.gmra.mrb[0].mxu0 %v1036
    %v1509 = vpop.f32.mrb[0].mxu0
    %v1510 = vadd.f32 %v1469, %v1509
    %v1511 = vpop.f32.mrb[0].mxu0
    %v1512 = vadd.f32 %v1471, %v1511
    %v1513 = vpop.f32.mrb[0].mxu0
    %v1514 = vpop.f32.mrb[0].mxu0
    %1515 = vdwg.mxu0
    %1516 = vst [vmem:[#allocation8] sm:$0xff] %v1510
    %1517 = vst [vmem:[#allocation8 + $0x8] sm:$0xff] %v1512
    // Predicated region
    $region34: #{tpu_custom_call.1} parent=1 // pred_check
      _
    $region35: #{tpu_custom_call.1} parent=1 // pred_check_branch
      %1519 = sbr.rel (0) target = $region37
    $region36: #{tpu_custom_call.1} parent=1 // pred_region
      %s1521 = ssub.s32 256, 256
      %1522 = vsyncadd [#allocation4], %s1521
      %s1524 = sshll.u32 [#allocation8], 4
      %s1525 = int_to_ptr.vmem [resolvable:$true] %s1524
      %1527 = dma.vmem_to_hbm [thread:$0]  %s1525, 256, %s5, [#allocation4]
    $region37: #{tpu_custom_call.1} parent=1 // pred_fallthru
      _
    // Predicated region
    $region38: #{tpu_custom_call.1} parent=1 // pred_check
      _
    $region39: #{tpu_custom_call.1} parent=1 // pred_check_branch
      %1529 = sbr.rel (0) target = $region41
    $region40: #{tpu_custom_call.1} parent=1 // pred_region
      %1530 = dma.done [#allocation4], 256
    $region41: #{tpu_custom_call.1} parent=1 // pred_fallthru
      _
    %1531 = vsyncpa [#allocation3], 1
    %1532 = vsyncpa [#allocation6], 1
    %1533 = vsyncpa [#allocation4], 1

</llo_original>
